<compile_context>
chip_gen: v7x
topology: tpu7x:2x2x1
jax: 0.10.0
libtpu: 0.0.40
codegen_flags: <defaults>
</compile_context>

<pallas_src>
import jax
import jax.numpy as jnp
from jax.experimental import pallas as pl
from jax.experimental.pallas import tpu as pltpu


def _round_up(x, m):
    return (x + m - 1) // m * m


def _patch_embed_kernel(p_ref, w_ref, b_ref, o_ref):
    # p_ref: [TM, Kp] compute dtype (streamed, double-buffered M-tiles)
    # w_ref: [Kp, Np] compute dtype (VMEM-resident, single-buffered)
    # b_ref: [1,  Np] f32           (VMEM-resident, single-buffered)
    # o_ref: [TM, Np] out dtype (bf16 by default -> half-size HBM write)
    acc = jnp.dot(p_ref[...], w_ref[...], preferred_element_type=jnp.float32)
    o_ref[...] = (acc + b_ref[...]).astype(o_ref.dtype)


def _vmem_budgets():
    """Generation-aware (streamed working-set budget, vmem_limit) in bytes."""
    try:
        cap = pltpu.get_tpu_info().vmem_capacity_bytes
    except Exception:
        cap = 64 * 1024 * 1024  # conservative default: v7x per-core capacity
    if cap >= 96 * 1024 * 1024:          # v5e / v6e: 128 MiB per core
        return 48 * 1024 * 1024, 64 * 1024 * 1024
    return 22 * 1024 * 1024, 40 * 1024 * 1024   # v7x: 64 MiB per core


def _pick_tm(M, tm_cap):
    """Largest M-tile <= cap, preferring zero M-padding (MXU waste on v5e) and
    an even number of grid steps (v7x megacore balance)."""
    tm_cap = max(8, min(int(tm_cap), 4096, _round_up(M, 8)))
    tm_cap -= tm_cap % 8
    best_score, best_tm = None, 8
    for tm in range(tm_cap, 7, -8):
        mp = _round_up(M, tm)
        grid = mp // tm
        pad = mp - M
        # Penalize odd grids, and a single-tile grid when there is enough work
        # to split across both v7x TensorCores.
        uneven = 1 if (grid % 2 == 1 and (grid > 1 or M > 1024)) else 0
        score = (pad, uneven, -tm)
        if best_score is None or score < best_score:
            best_score, best_tm = score, tm
    return best_tm


def patch_embedding(x, weight, bias, patch_size, *,
                    compute_dtype=jnp.bfloat16, out_dtype=None,
                    channels_last=False):
    """Equivalent of nn.Conv2d(C, D, kernel_size=P, stride=P)(x).

    x:      [B, C, H, W]   (NCHW, like PyTorch)
    weight: [D, C, P, P]   (PyTorch conv weight layout)
    bias:   [D]
    returns [B, D, H//P, W//P]  (or [B, H//P, W//P, D] if channels_last=True)
    """
    B, C, H, W = x.shape
    D = weight.shape[0]
    P = patch_size
    assert H % P == 0 and W % P == 0, "H and W must be multiples of patch_size"
    Hp, Wp = H // P, W // P
    nP = Hp * Wp

    M = B * nP
    K = C * P * P
    N = D
    out_dtype = compute_dtype if out_dtype is None else out_dtype

    # Pad contraction / output dims to 128 lanes (lane-dense stores, full MXU
    # tiles on every generation).  v5e note: keep 128 (its MXU is 128x128).
    Kp = _round_up(K, 128)
    Np = _round_up(N, 128)

    # --- glue: extract non-overlapping PxP patches -> [M, K] (lanes-last) ---
    # Cast FIRST so the im2col relayout pass moves compute_dtype, not f32.
    # TODO(synk): fuse this im2col relayout into the tile DMA via a
    # higher-rank BlockSpec over the [B, Hp, Wp, C, P, P] view to remove the
    # extra HBM pass entirely.
    xc = x.astype(compute_dtype)
    patches = xc.reshape(B, C, Hp, P, Wp, P)
    patches = patches.transpose(0, 2, 4, 1, 3, 5)   # [B, Hp, Wp, C, P, P]
    patches = patches.reshape(M, K)                 # [M, K]

    # --- glue: conv weight -> [Kp, Np] matmul weight (zero-padded), bias [1, Np] ---
    w_mat = weight.reshape(D, K).T.astype(compute_dtype)   # [K, N]
    w_mat = jnp.pad(w_mat, ((0, Kp - K), (0, Np - N)))
    b_mat = jnp.pad(bias.astype(jnp.float32).reshape(1, N), ((0, 0), (0, Np - N)))

    # --- VMEM-budget-derived M-tile (generation-aware) ---
    budget, vmem_limit = _vmem_budgets()
    c_itemsize = jnp.dtype(compute_dtype).itemsize
    o_itemsize = jnp.dtype(out_dtype).itemsize
    resident_bytes = Kp * Np * c_itemsize + Np * 4          # single-buffered w + b
    stream_per_row = 2 * Kp * c_itemsize + 2 * Np * o_itemsize  # 2x-buffered in/out
    tm_cap = max(8, (budget - resident_bytes) // stream_per_row)
    tm = _pick_tm(M, tm_cap)
    Mp = _round_up(M, tm)
    # TODO(synk): for very large D (>= ~2048) add a second "parallel" grid axis
    # over N so the weight is tiled instead of fully VMEM-resident.

    if Kp != K:
        patches = jnp.pad(patches, ((0, 0), (0, Kp - K)))
    if Mp != M:
        patches = jnp.pad(patches, ((0, Mp - M), (0, 0)))

    cost = pl.CostEstimate(
        flops=2 * Mp * Kp * Np,
        transcendentals=0,
        bytes_accessed=(Mp * Kp * c_itemsize + Kp * Np * c_itemsize
                        + Np * 4 + Mp * Np * o_itemsize),
    )

    def _run(single_buffer_weight):
        resident_kwargs = (
            dict(pipeline_mode=pl.Buffered(1)) if single_buffer_weight else {})
        return pl.pallas_call(
            _patch_embed_kernel,
            out_shape=jax.ShapeDtypeStruct((Mp, Np), out_dtype),
            grid_spec=pltpu.PrefetchScalarGridSpec(
                num_scalar_prefetch=0,
                grid=(Mp // tm,),
                in_specs=[
                    # streamed, double-buffered M-tiles
                    pl.BlockSpec((tm, Kp), lambda i: (i, 0)),
                    # VMEM-resident weight / bias (constant block index)
                    pl.BlockSpec((Kp, Np), lambda i: (0, 0), **resident_kwargs),
                    pl.BlockSpec((1, Np), lambda i: (0, 0), **resident_kwargs),
                ],
                out_specs=pl.BlockSpec((tm, Np), lambda i: (i, 0)),
            ),
            compiler_params=pltpu.CompilerParams(
                dimension_semantics=("parallel",),   # megacore M-sharding on v7x
                vmem_limit_bytes=vmem_limit,
            ),
            cost_estimate=cost,
        )(patches, w_mat, b_mat)

    try:
        out = _run(True)
    except Exception:
        # Fallback if single-buffering via pl.Buffered(1) is unsupported on the
        # installed jax version.
        out = _run(False)

    # --- glue: drop padding; keep lane-dense layout when possible ---
    out = out[:M, :N]
    if channels_last:
        return out.reshape(B, Hp, Wp, D)             # free reshape, no transpose
    # PyTorch conv output layout [B, D, Hp, Wp]; transpose runs on the narrow
    # out_dtype (half the HBM traffic of the previous f32 transpose).
    return out.reshape(B, Hp, Wp, D).transpose(0, 3, 1, 2)


if __name__ == "__main__":
    # Shapes consistent with the module spec: conv in_channels=3,
    # kernel=stride=patch_size=16, vector_dim=256; small batch / spatial.
    B, C, H, W = 2, 3, 32, 32
    patch_size = 16
    vector_dim = 256

    key = jax.random.PRNGKey(0)
    kx, kw, kb = jax.random.split(key, 3)

    x = jax.random.normal(kx, (B, C, H, W), dtype=jnp.float32)
    # Deterministic synthetic parameters (PyTorch conv weight layout [D, C, P, P]).
    weight = jax.random.normal(
        kw, (vector_dim, C, patch_size, patch_size), dtype=jnp.float32) * 0.02
    bias = jax.random.normal(kb, (vector_dim,), dtype=jnp.float32) * 0.02

    out = patch_embedding(x, weight, bias, patch_size)
    out = jax.block_until_ready(out)

    # Sanity check against XLA's conv (reference semantics of nn.Conv2d).
    # Tolerances loosened for the bf16 compute + bf16 output path (f32 accum).
    ref = jax.lax.conv_general_dilated(
        x, weight,
        window_strides=(patch_size, patch_size),
        padding="VALID",
        dimension_numbers=("NCHW", "OIHW", "NCHW"),
    ) + bias.reshape(1, vector_dim, 1, 1)
    assert out.shape == (B, vector_dim, H // patch_size, W // patch_size)
    assert jnp.allclose(out.astype(jnp.float32), ref, atol=3e-2, rtol=3e-2)

    print("KERNEL_OK")
</pallas_src>

<mosaic_0001>
module attributes {stable_mosaic.version = 11 : i64} {
  func.func @_patch_embed_kernel(%arg0: i32, %arg1: memref<8x768xbf16, #tpu.memory_space<vmem>>, %arg2: memref<768x256xbf16, #tpu.memory_space<vmem>>, %arg3: memref<1x256xf32, #tpu.memory_space<vmem>>, %arg4: memref<8x256xbf16, #tpu.memory_space<vmem>>) attributes {dimension_semantics = [#tpu.dimension_semantics<parallel>], iteration_bounds = array<i64: 1>, scalar_prefetch = 0 : i64, scratch_operands = 0 : i64, tpu.core_type = #tpu.core_type<tc>, window_params = [{transform_indices = @transform_0, window_bounds = array<i64: 8, 768>}, {pipeline_mode = #tpu.pipeline_mode<synchronous>, transform_indices = @transform_1, window_bounds = array<i64: 768, 256>}, {pipeline_mode = #tpu.pipeline_mode<synchronous>, transform_indices = @transform_2, window_bounds = array<i64: 1, 256>}, {transform_indices = @transform_3, window_bounds = array<i64: 8, 256>}]} {
    %c0 = arith.constant 0 : index
    %c0_0 = arith.constant 0 : index
    %0 = vector.load %arg1[%c0, %c0_0] : memref<8x768xbf16, #tpu.memory_space<vmem>>, vector<8x768xbf16>
    %c0_1 = arith.constant 0 : index
    %c0_2 = arith.constant 0 : index
    %1 = vector.load %arg2[%c0_1, %c0_2] : memref<768x256xbf16, #tpu.memory_space<vmem>>, vector<768x256xbf16>
    %cst = arith.constant dense<0.000000e+00> : vector<8x256xf32>
    %2 = tpu.matmul %0, %1, %cst {dimension_numbers = #tpu.dot_dimension_numbers<[1], [0], [0], [1], [0, 0, 1, 1], [], []>} : vector<8x768xbf16>, vector<768x256xbf16>, vector<8x256xf32> -> vector<8x256xf32>
    %c0_3 = arith.constant 0 : index
    %c0_4 = arith.constant 0 : index
    %3 = vector.load %arg3[%c0_3, %c0_4] : memref<1x256xf32, #tpu.memory_space<vmem>>, vector<1x256xf32>
    %4 = vector.broadcast %3 : vector<1x256xf32> to vector<8x256xf32>
    %5 = arith.addf %2, %4 : vector<8x256xf32>
    %6 = arith.truncf %5 : vector<8x256xf32> to vector<8x256xbf16>
    %c0_5 = arith.constant 0 : index
    %c0_6 = arith.constant 0 : index
    %7 = vector.load %arg4[%c0_5, %c0_6] : memref<8x256xbf16, #tpu.memory_space<vmem>>, vector<8x256xbf16>
    tpu.vector_store %arg4[%c0_5, %c0_6], %6 {strides = array<i32>} : memref<8x256xbf16, #tpu.memory_space<vmem>>, vector<8x256xbf16>,
    return
  }
  func.func @transform_0(%arg0: i32) -> (i32, i32) {
    %c0_i32 = arith.constant 0 : i32
    %c0_i32_0 = arith.constant 0 : i32
    return %arg0, %c0_i32 : i32, i32
  }
  func.func @transform_1(%arg0: i32) -> (i32, i32) {
    %c0_i32 = arith.constant 0 : i32
    %c0_i32_0 = arith.constant 0 : i32
    %c0_i32_1 = arith.constant 0 : i32
    return %c0_i32, %c0_i32_0 : i32, i32
  }
  func.func @transform_2(%arg0: i32) -> (i32, i32) {
    %c0_i32 = arith.constant 0 : i32
    %c0_i32_0 = arith.constant 0 : i32
    %c0_i32_1 = arith.constant 0 : i32
    return %c0_i32, %c0_i32_0 : i32, i32
  }
  func.func @transform_3(%arg0: i32) -> (i32, i32) {
    %c0_i32 = arith.constant 0 : i32
    %c0_i32_0 = arith.constant 0 : i32
    return %arg0, %c0_i32 : i32, i32
  }
}

module attributes {stable_mosaic.version = 11 : i64} {
  func.func @_patch_embed_kernel(%arg0: i32, %arg1: memref<8x768xbf16, #tpu.memory_space<vmem>>, %arg2: memref<768x256xbf16, #tpu.memory_space<vmem>>, %arg3: memref<1x256xf32, #tpu.memory_space<vmem>>, %arg4: memref<8x256xbf16, #tpu.memory_space<vmem>>) attributes {dimension_semantics = [#tpu.dimension_semantics<parallel>], iteration_bounds = array<i64: 1>, scalar_prefetch = 0 : i64, scratch_operands = 0 : i64, tpu.core_type = #tpu.core_type<tc>, window_params = [{transform_indices = @transform_0, window_bounds = array<i64: 8, 768>}, {pipeline_mode = #tpu.pipeline_mode<synchronous>, transform_indices = @transform_1, window_bounds = array<i64: 768, 256>}, {pipeline_mode = #tpu.pipeline_mode<synchronous>, transform_indices = @transform_2, window_bounds = array<i64: 1, 256>}, {transform_indices = @transform_3, window_bounds = array<i64: 8, 256>}]} {
    %c0 = arith.constant 0 : index
    %c0_0 = arith.constant 0 : index
    %0 = vector.load %arg1[%c0, %c0_0] : memref<8x768xbf16, #tpu.memory_space<vmem>>, vector<8x768xbf16>
    %c0_1 = arith.constant 0 : index
    %c0_2 = arith.constant 0 : index
    %1 = vector.load %arg2[%c0_1, %c0_2] : memref<768x256xbf16, #tpu.memory_space<vmem>>, vector<768x256xbf16>
    %cst = arith.constant dense<0.000000e+00> : vector<8x256xf32>
    %2 = tpu.matmul %0, %1, %cst {dimension_numbers = #tpu.dot_dimension_numbers<[1], [0], [0], [1], [0, 0, 1, 1], [], []>} : vector<8x768xbf16>, vector<768x256xbf16>, vector<8x256xf32> -> vector<8x256xf32>
    %c0_3 = arith.constant 0 : index
    %c0_4 = arith.constant 0 : index
    %3 = vector.load %arg3[%c0_3, %c0_4] : memref<1x256xf32, #tpu.memory_space<vmem>>, vector<1x256xf32>
    %4 = vector.broadcast %3 : vector<1x256xf32> to vector<8x256xf32>
    %5 = arith.addf %2, %4 : vector<8x256xf32>
    %6 = arith.truncf %5 : vector<8x256xf32> to vector<8x256xbf16>
    %c0_5 = arith.constant 0 : index
    %c0_6 = arith.constant 0 : index
    %7 = vector.load %arg4[%c0_5, %c0_6] : memref<8x256xbf16, #tpu.memory_space<vmem>>, vector<8x256xbf16>
    tpu.vector_store %arg4[%c0_5, %c0_6], %6 {strides = array<i32>} : memref<8x256xbf16, #tpu.memory_space<vmem>>, vector<8x256xbf16>,
    return
  }
  func.func @transform_0(%arg0: i32) -> (i32, i32) {
    %c0_i32 = arith.constant 0 : i32
    %c0_i32_0 = arith.constant 0 : i32
    return %arg0, %c0_i32 : i32, i32
  }
  func.func @transform_1(%arg0: i32) -> (i32, i32) {
    %c0_i32 = arith.constant 0 : i32
    %c0_i32_0 = arith.constant 0 : i32
    %c0_i32_1 = arith.constant 0 : i32
    return %c0_i32, %c0_i32_0 : i32, i32
  }
  func.func @transform_2(%arg0: i32) -> (i32, i32) {
    %c0_i32 = arith.constant 0 : i32
    %c0_i32_0 = arith.constant 0 : i32
    %c0_i32_1 = arith.constant 0 : i32
    return %c0_i32, %c0_i32_0 : i32, i32
  }
  func.func @transform_3(%arg0: i32) -> (i32, i32) {
    %c0_i32 = arith.constant 0 : i32
    %c0_i32_0 = arith.constant 0 : i32
    return %arg0, %c0_i32 : i32, i32
  }
}

</mosaic_0001>

<llo_original>
// kernel: tpu_custom_call.1
$region0: #{tpu_custom_call.1}
  #allocation0 [shape = 'u32[]', space=smem, size = 0x4, offset = 0x4, fixed_abs, tag = 'smem constant byte address 0x4 - core index']
  #allocation1 [shape = 'u32[144,128]{1,0:T(1,128)}', space=vmem, size = 0x12000, scoped, tag = 'internal scratch']
  %s0 = inlined_call_operand.hbm [shape: bf16[8,768], index: 0, kind: input, shape index: {}]
  %s1 = inlined_call_operand.hbm [shape: bf16[768,256], index: 1, kind: input, shape index: {}]
  %s2 = inlined_call_operand.vmem [shape: f32[1,256], index: 2, kind: input, shape index: {}]
  %s3 = inlined_call_operand.hbm [shape: bf16[8,256], index: 3, kind: output, shape index: {}]
  %s4 = sld [smem:[#allocation0]]
  $region30: #{tpu_custom_call.1} parent=0
    _
  %s6 = ssub.s32 1, %s4
  %s7 = scalar_select 0, %s6, %s4
  $region1: #{tpu_custom_call.1} parent=0
    #allocation2 [shape = 'u8[12288]{0}', space=vmem, size = 0x3000, scoped, tag = 'input window, operand 0, single buffered']
    #allocation3 [shape = 's32[1]{0}', space=sflag, size = 0x4, scoped, tag = 'scoped memory for tpu_custom_call.1']
    #allocation4 [shape = 's32[1]{0}', space=sflag, size = 0x4, scoped, tag = 'scoped memory for tpu_custom_call.1']
    #allocation5 [shape = 'u8[393216]{0}', space=vmem, size = 0x60000, scoped, tag = 'input window, operand 1, single buffered']
    #allocation6 [shape = 's32[1]{0}', space=sflag, size = 0x4, scoped, tag = 'scoped memory for tpu_custom_call.1']
    #allocation7 [shape = 'u8[4096]{0}', space=vmem, size = 0x1000, scoped, tag = 'output window, operand 0, single buffered']
    %8 = vsyncpa [#allocation3], 0
    %9 = vsyncpa [#allocation6], 0
    %10 = vsyncpa [#allocation4], 0
    // Predicated region
    $region2: #{tpu_custom_call.1} parent=1 // pred_check
      _
    $region3: #{tpu_custom_call.1} parent=1 // pred_check_branch
      %12 = sbr.rel (0) target = $region5
    $region4: #{tpu_custom_call.1} parent=1 // pred_region
      %s14 = ssub.s32 384, 384
      %15 = vsyncadd [#allocation3], %s14
      %s17 = sshll.u32 [#allocation2], 4
      %s18 = int_to_ptr.vmem [resolvable:$true] %s17
      %20 = dma.hbm_to_vmem [thread:$0]  %s0, 384, %s18, [#allocation3]
    $region5: #{tpu_custom_call.1} parent=1 // pred_fallthru
      _
    // Predicated region
    $region6: #{tpu_custom_call.1} parent=1 // pred_check
      _
    $region7: #{tpu_custom_call.1} parent=1 // pred_check_branch
      %22 = sbr.rel (0) target = $region9
    $region8: #{tpu_custom_call.1} parent=1 // pred_region
      %s24 = ssub.s32 12288, 12288
      %25 = vsyncadd [#allocation6], %s24
      %s26 = sshll.u32 [#allocation5], 4
      %s27 = int_to_ptr.vmem [resolvable:$true] %s26
      %32 = dma.hbm_to_vmem [thread:$0]  %s1, 12288, %s27, [#allocation6], 128, 128, 8
    $region9: #{tpu_custom_call.1} parent=1 // pred_fallthru
      _
    // Predicated region
    $region10: #{tpu_custom_call.1} parent=1 // pred_check
      _
    $region11: #{tpu_custom_call.1} parent=1 // pred_check_branch
      %34 = sbr.rel (0) target = $region13
    $region12: #{tpu_custom_call.1} parent=1 // pred_region
      _
    $region13: #{tpu_custom_call.1} parent=1 // pred_fallthru
      _
    // Predicated region
    $region14: #{tpu_custom_call.1} parent=1 // pred_check
      _
    $region15: #{tpu_custom_call.1} parent=1 // pred_check_branch
      %36 = sbr.rel (0) target = $region17
    $region16: #{tpu_custom_call.1} parent=1 // pred_region
      %37 = dma.done [#allocation3], 384
    $region17: #{tpu_custom_call.1} parent=1 // pred_fallthru
      _
    // Predicated region
    $region18: #{tpu_custom_call.1} parent=1 // pred_check
      _
    $region19: #{tpu_custom_call.1} parent=1 // pred_check_branch
      %39 = sbr.rel (0) target = $region21
    $region20: #{tpu_custom_call.1} parent=1 // pred_region
      %40 = dma.done [#allocation6], 12288
    $region21: #{tpu_custom_call.1} parent=1 // pred_fallthru
      _
    %v41 = vld [vmem:[#allocation2] sm:$0xff]
    %v42 = vld [vmem:[#allocation2 + $0x8] sm:$0xff]
    %v43 = vld [vmem:[#allocation2 + $0x10] sm:$0xff]
    %v44 = vld [vmem:[#allocation5] sm:$0xff]
    %v45 = vld [vmem:[#allocation5 + $0x8] sm:$0xff]
    %v46 = vld [vmem:[#allocation5 + $0x10] sm:$0xff]
    %v47 = vld [vmem:[#allocation5 + $0x18] sm:$0xff]
    %v48 = vld [vmem:[#allocation5 + $0x20] sm:$0xff]
    %v49 = vld [vmem:[#allocation5 + $0x28] sm:$0xff]
    %v50 = vld [vmem:[#allocation5 + $0x30] sm:$0xff]
    %v51 = vld [vmem:[#allocation5 + $0x38] sm:$0xff]
    %v52 = vld [vmem:[#allocation5 + $0x40] sm:$0xff]
    %v53 = vld [vmem:[#allocation5 + $0x48] sm:$0xff]
    %v54 = vld [vmem:[#allocation5 + $0x50] sm:$0xff]
    %v55 = vld [vmem:[#allocation5 + $0x58] sm:$0xff]
    %v56 = vld [vmem:[#allocation5 + $0x60] sm:$0xff]
    %v57 = vld [vmem:[#allocation5 + $0x68] sm:$0xff]
    %v58 = vld [vmem:[#allocation5 + $0x70] sm:$0xff]
    %v59 = vld [vmem:[#allocation5 + $0x78] sm:$0xff]
    %v60 = vld [vmem:[#allocation5 + $0x80] sm:$0xff]
    %v61 = vld [vmem:[#allocation5 + $0x88] sm:$0xff]
    %v62 = vld [vmem:[#allocation5 + $0x90] sm:$0xff]
    %v63 = vld [vmem:[#allocation5 + $0x98] sm:$0xff]
    %v64 = vld [vmem:[#allocation5 + $0xa0] sm:$0xff]
    %v65 = vld [vmem:[#allocation5 + $0xa8] sm:$0xff]
    %v66 = vld [vmem:[#allocation5 + $0xb0] sm:$0xff]
    %v67 = vld [vmem:[#allocation5 + $0xb8] sm:$0xff]
    %v68 = vld [vmem:[#allocation5 + $0xc0] sm:$0xff]
    %v69 = vld [vmem:[#allocation5 + $0xc8] sm:$0xff]
    %v70 = vld [vmem:[#allocation5 + $0xd0] sm:$0xff]
    %v71 = vld [vmem:[#allocation5 + $0xd8] sm:$0xff]
    %v72 = vld [vmem:[#allocation5 + $0xe0] sm:$0xff]
    %v73 = vld [vmem:[#allocation5 + $0xe8] sm:$0xff]
    %v74 = vld [vmem:[#allocation5 + $0xf0] sm:$0xff]
    %v75 = vld [vmem:[#allocation5 + $0xf8] sm:$0xff]
    %v76 = vld [vmem:[#allocation5 + $0x100] sm:$0xff]
    %v77 = vld [vmem:[#allocation5 + $0x108] sm:$0xff]
    %v78 = vld [vmem:[#allocation5 + $0x110] sm:$0xff]
    %v79 = vld [vmem:[#allocation5 + $0x118] sm:$0xff]
    %v80 = vld [vmem:[#allocation5 + $0x120] sm:$0xff]
    %v81 = vld [vmem:[#allocation5 + $0x128] sm:$0xff]
    %v82 = vld [vmem:[#allocation5 + $0x130] sm:$0xff]
    %v83 = vld [vmem:[#allocation5 + $0x138] sm:$0xff]
    %v84 = vld [vmem:[#allocation5 + $0x140] sm:$0xff]
    %v85 = vld [vmem:[#allocation5 + $0x148] sm:$0xff]
    %v86 = vld [vmem:[#allocation5 + $0x150] sm:$0xff]
    %v87 = vld [vmem:[#allocation5 + $0x158] sm:$0xff]
    %v88 = vld [vmem:[#allocation5 + $0x160] sm:$0xff]
    %v89 = vld [vmem:[#allocation5 + $0x168] sm:$0xff]
    %v90 = vld [vmem:[#allocation5 + $0x170] sm:$0xff]
    %v91 = vld [vmem:[#allocation5 + $0x178] sm:$0xff]
    %v92 = vld [vmem:[#allocation5 + $0x180] sm:$0xff]
    %v93 = vld [vmem:[#allocation5 + $0x188] sm:$0xff]
    %v94 = vld [vmem:[#allocation5 + $0x190] sm:$0xff]
    %v95 = vld [vmem:[#allocation5 + $0x198] sm:$0xff]
    %v96 = vld [vmem:[#allocation5 + $0x1a0] sm:$0xff]
    %v97 = vld [vmem:[#allocation5 + $0x1a8] sm:$0xff]
    %v98 = vld [vmem:[#allocation5 + $0x1b0] sm:$0xff]
    %v99 = vld [vmem:[#allocation5 + $0x1b8] sm:$0xff]
    %v100 = vld [vmem:[#allocation5 + $0x1c0] sm:$0xff]
    %v101 = vld [vmem:[#allocation5 + $0x1c8] sm:$0xff]
    %v102 = vld [vmem:[#allocation5 + $0x1d0] sm:$0xff]
    %v103 = vld [vmem:[#allocation5 + $0x1d8] sm:$0xff]
    %v104 = vld [vmem:[#allocation5 + $0x1e0] sm:$0xff]
    %v105 = vld [vmem:[#allocation5 + $0x1e8] sm:$0xff]
    %v106 = vld [vmem:[#allocation5 + $0x1f0] sm:$0xff]
    %v107 = vld [vmem:[#allocation5 + $0x1f8] sm:$0xff]
    %v108 = vld [vmem:[#allocation5 + $0x200] sm:$0xff]
    %v109 = vld [vmem:[#allocation5 + $0x208] sm:$0xff]
    %v110 = vld [vmem:[#allocation5 + $0x210] sm:$0xff]
    %v111 = vld [vmem:[#allocation5 + $0x218] sm:$0xff]
    %v112 = vld [vmem:[#allocation5 + $0x220] sm:$0xff]
    %v113 = vld [vmem:[#allocation5 + $0x228] sm:$0xff]
    %v114 = vld [vmem:[#allocation5 + $0x230] sm:$0xff]
    %v115 = vld [vmem:[#allocation5 + $0x238] sm:$0xff]
    %v116 = vld [vmem:[#allocation5 + $0x240] sm:$0xff]
    %v117 = vld [vmem:[#allocation5 + $0x248] sm:$0xff]
    %v118 = vld [vmem:[#allocation5 + $0x250] sm:$0xff]
    %v119 = vld [vmem:[#allocation5 + $0x258] sm:$0xff]
    %v120 = vld [vmem:[#allocation5 + $0x260] sm:$0xff]
    %v121 = vld [vmem:[#allocation5 + $0x268] sm:$0xff]
    %v122 = vld [vmem:[#allocation5 + $0x270] sm:$0xff]
    %v123 = vld [vmem:[#allocation5 + $0x278] sm:$0xff]
    %v124 = vld [vmem:[#allocation5 + $0x280] sm:$0xff]
    %v125 = vld [vmem:[#allocation5 + $0x288] sm:$0xff]
    %v126 = vld [vmem:[#allocation5 + $0x290] sm:$0xff]
    %v127 = vld [vmem:[#allocation5 + $0x298] sm:$0xff]
    %v128 = vld [vmem:[#allocation5 + $0x2a0] sm:$0xff]
    %v129 = vld [vmem:[#allocation5 + $0x2a8] sm:$0xff]
    %v130 = vld [vmem:[#allocation5 + $0x2b0] sm:$0xff]
    %v131 = vld [vmem:[#allocation5 + $0x2b8] sm:$0xff]
    %v132 = vld [vmem:[#allocation5 + $0x2c0] sm:$0xff]
    %v133 = vld [vmem:[#allocation5 + $0x2c8] sm:$0xff]
    %v134 = vld [vmem:[#allocation5 + $0x2d0] sm:$0xff]
    %v135 = vld [vmem:[#allocation5 + $0x2d8] sm:$0xff]
    %v136 = vld [vmem:[#allocation5 + $0x2e0] sm:$0xff]
    %v137 = vld [vmem:[#allocation5 + $0x2e8] sm:$0xff]
    %v138 = vld [vmem:[#allocation5 + $0x2f0] sm:$0xff]
    %v139 = vld [vmem:[#allocation5 + $0x2f8] sm:$0xff]
    %v140 = vld [vmem:[%s2] sm:$0x3]
    %v142 = vlaneseq
    %v143 = vshrl.u32 %v142, 7
    %v144 = vsub.s32 0, %v143
    %v145 = vrot.slane %v140, %v144
    %v146 = vlaneseq
    %v147 = vshrl.u32 %v146, 7
    %v148 = vsub.s32 1, %v147
    %v149 = vrot.slane %v140, %v148
    %v155 = vunpack.c.l.b16 %v41
    %v156 = vunpack.c.h.b16 %v41
    %v157 = vunpack.c.l.b16 %v42
    %v158 = vunpack.c.h.b16 %v42
    %v159 = vunpack.c.l.b16 %v43
    %v160 = vunpack.c.h.b16 %v43
    %v161 = vpack.c.b16 %v155, %v155
    %v162 = vpack.c.b16 %v156, %v156
    %v163 = vpack.c.b16 %v157, %v157
    %v164 = vpack.c.b16 %v158, %v158
    %v165 = vpack.c.b16 %v159, %v159
    %v166 = vpack.c.b16 %v160, %v160
    %v269 = vunpack.c.l.b16 %v44
    %v270 = vunpack.c.h.b16 %v44
    %v271 = vunpack.c.l.b16 %v45
    %v272 = vunpack.c.h.b16 %v45
    %v273 = vunpack.c.l.b16 %v46
    %v274 = vunpack.c.h.b16 %v46
    %v275 = vunpack.c.l.b16 %v47
    %v276 = vunpack.c.h.b16 %v47
    %v277 = vunpack.c.l.b16 %v48
    %v278 = vunpack.c.h.b16 %v48
    %v279 = vunpack.c.l.b16 %v49
    %v280 = vunpack.c.h.b16 %v49
    %v281 = vunpack.c.l.b16 %v50
    %v282 = vunpack.c.h.b16 %v50
    %v283 = vunpack.c.l.b16 %v51
    %v284 = vunpack.c.h.b16 %v51
    %v285 = vunpack.c.l.b16 %v52
    %v286 = vunpack.c.h.b16 %v52
    %v287 = vunpack.c.l.b16 %v53
    %v288 = vunpack.c.h.b16 %v53
    %v289 = vunpack.c.l.b16 %v54
    %v290 = vunpack.c.h.b16 %v54
    %v291 = vunpack.c.l.b16 %v55
    %v292 = vunpack.c.h.b16 %v55
    %v293 = vunpack.c.l.b16 %v56
    %v294 = vunpack.c.h.b16 %v56
    %v295 = vunpack.c.l.b16 %v57
    %v296 = vunpack.c.h.b16 %v57
    %v297 = vunpack.c.l.b16 %v58
    %v298 = vunpack.c.h.b16 %v58
    %v299 = vunpack.c.l.b16 %v59
    %v300 = vunpack.c.h.b16 %v59
    %v301 = vunpack.c.l.b16 %v60
    %v302 = vunpack.c.h.b16 %v60
    %v303 = vunpack.c.l.b16 %v61
    %v304 = vunpack.c.h.b16 %v61
    %v305 = vunpack.c.l.b16 %v62
    %v306 = vunpack.c.h.b16 %v62
    %v307 = vunpack.c.l.b16 %v63
    %v308 = vunpack.c.h.b16 %v63
    %v309 = vunpack.c.l.b16 %v64
    %v310 = vunpack.c.h.b16 %v64
    %v311 = vunpack.c.l.b16 %v65
    %v312 = vunpack.c.h.b16 %v65
    %v313 = vunpack.c.l.b16 %v66
    %v314 = vunpack.c.h.b16 %v66
    %v315 = vunpack.c.l.b16 %v67
    %v316 = vunpack.c.h.b16 %v67
    %v317 = vunpack.c.l.b16 %v68
    %v318 = vunpack.c.h.b16 %v68
    %v319 = vunpack.c.l.b16 %v69
    %v320 = vunpack.c.h.b16 %v69
    %v321 = vunpack.c.l.b16 %v70
    %v322 = vunpack.c.h.b16 %v70
    %v323 = vunpack.c.l.b16 %v71
    %v324 = vunpack.c.h.b16 %v71
    %v325 = vunpack.c.l.b16 %v72
    %v326 = vunpack.c.h.b16 %v72
    %v327 = vunpack.c.l.b16 %v73
    %v328 = vunpack.c.h.b16 %v73
    %v329 = vunpack.c.l.b16 %v74
    %v330 = vunpack.c.h.b16 %v74
    %v331 = vunpack.c.l.b16 %v75
    %v332 = vunpack.c.h.b16 %v75
    %v333 = vunpack.c.l.b16 %v76
    %v334 = vunpack.c.h.b16 %v76
    %v335 = vunpack.c.l.b16 %v77
    %v336 = vunpack.c.h.b16 %v77
    %v337 = vunpack.c.l.b16 %v78
    %v338 = vunpack.c.h.b16 %v78
    %v339 = vunpack.c.l.b16 %v79
    %v340 = vunpack.c.h.b16 %v79
    %v341 = vunpack.c.l.b16 %v80
    %v342 = vunpack.c.h.b16 %v80
    %v343 = vunpack.c.l.b16 %v81
    %v344 = vunpack.c.h.b16 %v81
    %v345 = vunpack.c.l.b16 %v82
    %v346 = vunpack.c.h.b16 %v82
    %v347 = vunpack.c.l.b16 %v83
    %v348 = vunpack.c.h.b16 %v83
    %v349 = vunpack.c.l.b16 %v84
    %v350 = vunpack.c.h.b16 %v84
    %v351 = vunpack.c.l.b16 %v85
    %v352 = vunpack.c.h.b16 %v85
    %v353 = vunpack.c.l.b16 %v86
    %v354 = vunpack.c.h.b16 %v86
    %v355 = vunpack.c.l.b16 %v87
    %v356 = vunpack.c.h.b16 %v87
    %v357 = vunpack.c.l.b16 %v88
    %v358 = vunpack.c.h.b16 %v88
    %v359 = vunpack.c.l.b16 %v89
    %v360 = vunpack.c.h.b16 %v89
    %v361 = vunpack.c.l.b16 %v90
    %v362 = vunpack.c.h.b16 %v90
    %v363 = vunpack.c.l.b16 %v91
    %v364 = vunpack.c.h.b16 %v91
    %v365 = vunpack.c.l.b16 %v92
    %v366 = vunpack.c.h.b16 %v92
    %v367 = vunpack.c.l.b16 %v93
    %v368 = vunpack.c.h.b16 %v93
    %v369 = vunpack.c.l.b16 %v94
    %v370 = vunpack.c.h.b16 %v94
    %v371 = vunpack.c.l.b16 %v95
    %v372 = vunpack.c.h.b16 %v95
    %v373 = vunpack.c.l.b16 %v96
    %v374 = vunpack.c.h.b16 %v96
    %v375 = vunpack.c.l.b16 %v97
    %v376 = vunpack.c.h.b16 %v97
    %v377 = vunpack.c.l.b16 %v98
    %v378 = vunpack.c.h.b16 %v98
    %v379 = vunpack.c.l.b16 %v99
    %v380 = vunpack.c.h.b16 %v99
    %v381 = vunpack.c.l.b16 %v100
    %v382 = vunpack.c.h.b16 %v100
    %v383 = vunpack.c.l.b16 %v101
    %v384 = vunpack.c.h.b16 %v101
    %v385 = vunpack.c.l.b16 %v102
    %v386 = vunpack.c.h.b16 %v102
    %v387 = vunpack.c.l.b16 %v103
    %v388 = vunpack.c.h.b16 %v103
    %v389 = vunpack.c.l.b16 %v104
    %v390 = vunpack.c.h.b16 %v104
    %v391 = vunpack.c.l.b16 %v105
    %v392 = vunpack.c.h.b16 %v105
    %v393 = vunpack.c.l.b16 %v106
    %v394 = vunpack.c.h.b16 %v106
    %v395 = vunpack.c.l.b16 %v107
    %v396 = vunpack.c.h.b16 %v107
    %v397 = vunpack.c.l.b16 %v108
    %v398 = vunpack.c.h.b16 %v108
    %v399 = vunpack.c.l.b16 %v109
    %v400 = vunpack.c.h.b16 %v109
    %v401 = vunpack.c.l.b16 %v110
    %v402 = vunpack.c.h.b16 %v110
    %v403 = vunpack.c.l.b16 %v111
    %v404 = vunpack.c.h.b16 %v111
    %v405 = vunpack.c.l.b16 %v112
    %v406 = vunpack.c.h.b16 %v112
    %v407 = vunpack.c.l.b16 %v113
    %v408 = vunpack.c.h.b16 %v113
    %v409 = vunpack.c.l.b16 %v114
    %v410 = vunpack.c.h.b16 %v114
    %v411 = vunpack.c.l.b16 %v115
    %v412 = vunpack.c.h.b16 %v115
    %v413 = vunpack.c.l.b16 %v116
    %v414 = vunpack.c.h.b16 %v116
    %v415 = vunpack.c.l.b16 %v117
    %v416 = vunpack.c.h.b16 %v117
    %v417 = vunpack.c.l.b16 %v118
    %v418 = vunpack.c.h.b16 %v118
    %v419 = vunpack.c.l.b16 %v119
    %v420 = vunpack.c.h.b16 %v119
    %v421 = vunpack.c.l.b16 %v120
    %v422 = vunpack.c.h.b16 %v120
    %v423 = vunpack.c.l.b16 %v121
    %v424 = vunpack.c.h.b16 %v121
    %v425 = vunpack.c.l.b16 %v122
    %v426 = vunpack.c.h.b16 %v122
    %v427 = vunpack.c.l.b16 %v123
    %v428 = vunpack.c.h.b16 %v123
    %v429 = vunpack.c.l.b16 %v124
    %v430 = vunpack.c.h.b16 %v124
    %v431 = vunpack.c.l.b16 %v125
    %v432 = vunpack.c.h.b16 %v125
    %v433 = vunpack.c.l.b16 %v126
    %v434 = vunpack.c.h.b16 %v126
    %v435 = vunpack.c.l.b16 %v127
    %v436 = vunpack.c.h.b16 %v127
    %v437 = vunpack.c.l.b16 %v128
    %v438 = vunpack.c.h.b16 %v128
    %v439 = vunpack.c.l.b16 %v129
    %v440 = vunpack.c.h.b16 %v129
    %v441 = vunpack.c.l.b16 %v130
    %v442 = vunpack.c.h.b16 %v130
    %v443 = vunpack.c.l.b16 %v131
    %v444 = vunpack.c.h.b16 %v131
    %v445 = vunpack.c.l.b16 %v132
    %v446 = vunpack.c.h.b16 %v132
    %v447 = vunpack.c.l.b16 %v133
    %v448 = vunpack.c.h.b16 %v133
    %v449 = vunpack.c.l.b16 %v134
    %v450 = vunpack.c.h.b16 %v134
    %v451 = vunpack.c.l.b16 %v135
    %v452 = vunpack.c.h.b16 %v135
    %v453 = vunpack.c.l.b16 %v136
    %v454 = vunpack.c.h.b16 %v136
    %v455 = vunpack.c.l.b16 %v137
    %v456 = vunpack.c.h.b16 %v137
    %v457 = vunpack.c.l.b16 %v138
    %v458 = vunpack.c.h.b16 %v138
    %v459 = vunpack.c.l.b16 %v139
    %v460 = vunpack.c.h.b16 %v139
    %v461 = vpack.c.b16 %v271, %v269
    %v462 = vpack.c.b16 %v272, %v270
    %v463 = vpack.c.b16 %v275, %v273
    %v464 = vpack.c.b16 %v276, %v274
    %v465 = vpack.c.b16 %v279, %v277
    %v466 = vpack.c.b16 %v280, %v278
    %v467 = vpack.c.b16 %v283, %v281
    %v468 = vpack.c.b16 %v284, %v282
    %v469 = vpack.c.b16 %v287, %v285
    %v470 = vpack.c.b16 %v288, %v286
    %v471 = vpack.c.b16 %v291, %v289
    %v472 = vpack.c.b16 %v292, %v290
    %v473 = vpack.c.b16 %v295, %v293
    %v474 = vpack.c.b16 %v296, %v294
    %v475 = vpack.c.b16 %v299, %v297
    %v476 = vpack.c.b16 %v300, %v298
    %v477 = vpack.c.b16 %v303, %v301
    %v478 = vpack.c.b16 %v304, %v302
    %v479 = vpack.c.b16 %v307, %v305
    %v480 = vpack.c.b16 %v308, %v306
    %v481 = vpack.c.b16 %v311, %v309
    %v482 = vpack.c.b16 %v312, %v310
    %v483 = vpack.c.b16 %v315, %v313
    %v484 = vpack.c.b16 %v316, %v314
    %v485 = vpack.c.b16 %v319, %v317
    %v486 = vpack.c.b16 %v320, %v318
    %v487 = vpack.c.b16 %v323, %v321
    %v488 = vpack.c.b16 %v324, %v322
    %v489 = vpack.c.b16 %v327, %v325
    %v490 = vpack.c.b16 %v328, %v326
    %v491 = vpack.c.b16 %v331, %v329
    %v492 = vpack.c.b16 %v332, %v330
    %v493 = vpack.c.b16 %v335, %v333
    %v494 = vpack.c.b16 %v336, %v334
    %v495 = vpack.c.b16 %v339, %v337
    %v496 = vpack.c.b16 %v340, %v338
    %v497 = vpack.c.b16 %v343, %v341
    %v498 = vpack.c.b16 %v344, %v342
    %v499 = vpack.c.b16 %v347, %v345
    %v500 = vpack.c.b16 %v348, %v346
    %v501 = vpack.c.b16 %v351, %v349
    %v502 = vpack.c.b16 %v352, %v350
    %v503 = vpack.c.b16 %v355, %v353
    %v504 = vpack.c.b16 %v356, %v354
    %v505 = vpack.c.b16 %v359, %v357
    %v506 = vpack.c.b16 %v360, %v358
    %v507 = vpack.c.b16 %v363, %v361
    %v508 = vpack.c.b16 %v364, %v362
    %v509 = vpack.c.b16 %v367, %v365
    %v510 = vpack.c.b16 %v368, %v366
    %v511 = vpack.c.b16 %v371, %v369
    %v512 = vpack.c.b16 %v372, %v370
    %v513 = vpack.c.b16 %v375, %v373
    %v514 = vpack.c.b16 %v376, %v374
    %v515 = vpack.c.b16 %v379, %v377
    %v516 = vpack.c.b16 %v380, %v378
    %v517 = vpack.c.b16 %v383, %v381
    %v518 = vpack.c.b16 %v384, %v382
    %v519 = vpack.c.b16 %v387, %v385
    %v520 = vpack.c.b16 %v388, %v386
    %v521 = vpack.c.b16 %v391, %v389
    %v522 = vpack.c.b16 %v392, %v390
    %v523 = vpack.c.b16 %v395, %v393
    %v524 = vpack.c.b16 %v396, %v394
    %v525 = vpack.c.b16 %v399, %v397
    %v526 = vpack.c.b16 %v400, %v398
    %v527 = vpack.c.b16 %v403, %v401
    %v528 = vpack.c.b16 %v404, %v402
    %v529 = vpack.c.b16 %v407, %v405
    %v530 = vpack.c.b16 %v408, %v406
    %v531 = vpack.c.b16 %v411, %v409
    %v532 = vpack.c.b16 %v412, %v410
    %v533 = vpack.c.b16 %v415, %v413
    %v534 = vpack.c.b16 %v416, %v414
    %v535 = vpack.c.b16 %v419, %v417
    %v536 = vpack.c.b16 %v420, %v418
    %v537 = vpack.c.b16 %v423, %v421
    %v538 = vpack.c.b16 %v424, %v422
    %v539 = vpack.c.b16 %v427, %v425
    %v540 = vpack.c.b16 %v428, %v426
    %v541 = vpack.c.b16 %v431, %v429
    %v542 = vpack.c.b16 %v432, %v430
    %v543 = vpack.c.b16 %v435, %v433
    %v544 = vpack.c.b16 %v436, %v434
    %v545 = vpack.c.b16 %v439, %v437
    %v546 = vpack.c.b16 %v440, %v438
    %v547 = vpack.c.b16 %v443, %v441
    %v548 = vpack.c.b16 %v444, %v442
    %v549 = vpack.c.b16 %v447, %v445
    %v550 = vpack.c.b16 %v448, %v446
    %v551 = vpack.c.b16 %v451, %v449
    %v552 = vpack.c.b16 %v452, %v450
    %v553 = vpack.c.b16 %v455, %v453
    %v554 = vpack.c.b16 %v456, %v454
    %v555 = vpack.c.b16 %v459, %v457
    %v556 = vpack.c.b16 %v460, %v458
    %653 = vmatprep.subr.bf16.mxu0 %v462
    %654 = vmatpush1.bf16.msra.mxu0 %v461
    %655 = vmatprep.subr.bf16.mxu0 %v464
    %656 = vmatpush1.bf16.msra.mxu0 %v463
    %657 = vmatprep.subr.bf16.mxu0 %v466
    %658 = vmatpush1.bf16.msra.mxu0 %v465
    %659 = vmatprep.subr.bf16.mxu0 %v468
    %660 = vmatpush1.bf16.msra.mxu0 %v467
    %661 = vmatprep.subr.bf16.mxu0 %v470
    %662 = vmatpush1.bf16.msra.mxu0 %v469
    %663 = vmatprep.subr.bf16.mxu0 %v472
    %664 = vmatpush1.bf16.msra.mxu0 %v471
    %665 = vmatprep.subr.bf16.mxu0 %v474
    %666 = vmatpush1.bf16.msra.mxu0 %v473
    %667 = vmatprep.subr.bf16.mxu0 %v476
    %668 = vmatpush1.bf16.msra.mxu0 %v475
    %669 = vmatprep.subr.bf16.mxu0 %v478
    %670 = vmatpush1.bf16.msra.mxu0 %v477
    %671 = vmatprep.subr.bf16.mxu0 %v480
    %672 = vmatpush1.bf16.msra.mxu0 %v479
    %673 = vmatprep.subr.bf16.mxu0 %v482
    %674 = vmatpush1.bf16.msra.mxu0 %v481
    %675 = vmatprep.subr.bf16.mxu0 %v484
    %676 = vmatpush1.bf16.msra.mxu0 %v483
    %677 = vmatprep.subr.bf16.mxu0 %v486
    %678 = vmatpush1.bf16.msra.mxu0 %v485
    %679 = vmatprep.subr.bf16.mxu0 %v488
    %680 = vmatpush1.bf16.msra.mxu0 %v487
    %681 = vmatprep.subr.bf16.mxu0 %v490
    %682 = vmatpush1.bf16.msra.mxu0 %v489
    %683 = vmatprep.subr.bf16.mxu0 %v492
    %684 = vmatpush1.bf16.msra.mxu0 %v491
    %685 = vmatprep.mubr.bf16.mxu0 %v162
    %686 = vmatmul.mubr.bf16.gmra.mrb[0].mxu0 %v161
    %v687 = vpop.f32.mrb[0].mxu0
    %v688 = vadd.f32 %v145, %v687
    %v689 = vpop.f32.mrb[0].mxu0
    %v690 = vadd.f32 %v149, %v689
    %v691 = vpop.f32.mrb[0].mxu0
    %v692 = vpop.f32.mrb[0].mxu0
    %693 = vdwg.mxu0
    %694 = vmatprep.subr.bf16.mxu0 %v494
    %695 = vmatpush1.bf16.msra.mxu0 %v493
    %696 = vmatprep.subr.bf16.mxu0 %v496
    %697 = vmatpush1.bf16.msra.mxu0 %v495
    %698 = vmatprep.subr.bf16.mxu0 %v498
    %699 = vmatpush1.bf16.msra.mxu0 %v497
    %700 = vmatprep.subr.bf16.mxu0 %v500
    %701 = vmatpush1.bf16.msra.mxu0 %v499
    %702 = vmatprep.subr.bf16.mxu0 %v502
    %703 = vmatpush1.bf16.msra.mxu0 %v501
    %704 = vmatprep.subr.bf16.mxu0 %v504
    %705 = vmatpush1.bf16.msra.mxu0 %v503
    %706 = vmatprep.subr.bf16.mxu0 %v506
    %707 = vmatpush1.bf16.msra.mxu0 %v505
    %708 = vmatprep.subr.bf16.mxu0 %v508
    %709 = vmatpush1.bf16.msra.mxu0 %v507
    %710 = vmatprep.subr.bf16.mxu0 %v510
    %711 = vmatpush1.bf16.msra.mxu0 %v509
    %712 = vmatprep.subr.bf16.mxu0 %v512
    %713 = vmatpush1.bf16.msra.mxu0 %v511
    %714 = vmatprep.subr.bf16.mxu0 %v514
    %715 = vmatpush1.bf16.msra.mxu0 %v513
    %716 = vmatprep.subr.bf16.mxu0 %v516
    %717 = vmatpush1.bf16.msra.mxu0 %v515
    %718 = vmatprep.subr.bf16.mxu0 %v518
    %719 = vmatpush1.bf16.msra.mxu0 %v517
    %720 = vmatprep.subr.bf16.mxu0 %v520
    %721 = vmatpush1.bf16.msra.mxu0 %v519
    %722 = vmatprep.subr.bf16.mxu0 %v522
    %723 = vmatpush1.bf16.msra.mxu0 %v521
    %724 = vmatprep.subr.bf16.mxu0 %v524
    %725 = vmatpush1.bf16.msra.mxu0 %v523
    %726 = vmatprep.mubr.bf16.mxu0 %v164
    %727 = vmatmul.mubr.bf16.gmra.mrb[0].mxu0 %v163
    %v728 = vpop.f32.mrb[0].mxu0
    %v729 = vadd.f32 %v688, %v728
    %v730 = vpop.f32.mrb[0].mxu0
    %v731 = vadd.f32 %v690, %v730
    %v732 = vpop.f32.mrb[0].mxu0
    %v733 = vpop.f32.mrb[0].mxu0
    %734 = vdwg.mxu0
    %735 = vmatprep.subr.bf16.mxu0 %v526
    %736 = vmatpush1.bf16.msra.mxu0 %v525
    %737 = vmatprep.subr.bf16.mxu0 %v528
    %738 = vmatpush1.bf16.msra.mxu0 %v527
    %739 = vmatprep.subr.bf16.mxu0 %v530
    %740 = vmatpush1.bf16.msra.mxu0 %v529
    %741 = vmatprep.subr.bf16.mxu0 %v532
    %742 = vmatpush1.bf16.msra.mxu0 %v531
    %743 = vmatprep.subr.bf16.mxu0 %v534
    %744 = vmatpush1.bf16.msra.mxu0 %v533
    %745 = vmatprep.subr.bf16.mxu0 %v536
    %746 = vmatpush1.bf16.msra.mxu0 %v535
    %747 = vmatprep.subr.bf16.mxu0 %v538
    %748 = vmatpush1.bf16.msra.mxu0 %v537
    %749 = vmatprep.subr.bf16.mxu0 %v540
    %750 = vmatpush1.bf16.msra.mxu0 %v539
    %751 = vmatprep.subr.bf16.mxu0 %v542
    %752 = vmatpush1.bf16.msra.mxu0 %v541
    %753 = vmatprep.subr.bf16.mxu0 %v544
    %754 = vmatpush1.bf16.msra.mxu0 %v543
    %755 = vmatprep.subr.bf16.mxu0 %v546
    %756 = vmatpush1.bf16.msra.mxu0 %v545
    %757 = vmatprep.subr.bf16.mxu0 %v548
    %758 = vmatpush1.bf16.msra.mxu0 %v547
    %759 = vmatprep.subr.bf16.mxu0 %v550
    %760 = vmatpush1.bf16.msra.mxu0 %v549
    %761 = vmatprep.subr.bf16.mxu0 %v552
    %762 = vmatpush1.bf16.msra.mxu0 %v551
    %763 = vmatprep.subr.bf16.mxu0 %v554
    %764 = vmatpush1.bf16.msra.mxu0 %v553
    %765 = vmatprep.subr.bf16.mxu0 %v556
    %766 = vmatpush1.bf16.msra.mxu0 %v555
    %767 = vmatprep.mubr.bf16.mxu0 %v166
    %768 = vmatmul.mubr.bf16.gmra.mrb[0].mxu0 %v165
    %v769 = vpop.f32.mrb[0].mxu0
    %v770 = vadd.f32 %v729, %v769
    %v771 = vpop.f32.mrb[0].mxu0
    %v772 = vadd.f32 %v731, %v771
    %v773 = vpop.f32.mrb[0].mxu0
    %v774 = vpop.f32.mrb[0].mxu0
    %775 = vdwg.mxu0
    %v776 = vpack.c.bf16 %v770, %v770
    %v777 = vpack.c.bf16 %v772, %v772
    %v780 = vunpack.c.l.b16 %v776
    %v781 = vunpack.c.l.b16 %v777
    %v782 = vpack.c.b16 %v781, %v780
    %784 = vst [vmem:[#allocation7] sm:$0xff] %v782
    // Predicated region
    $region22: #{tpu_custom_call.1} parent=1 // pred_check
      _
    $region23: #{tpu_custom_call.1} parent=1 // pred_check_branch
      %786 = sbr.rel (0) target = $region25
    $region24: #{tpu_custom_call.1} parent=1 // pred_region
      %s788 = ssub.s32 128, 128
      %789 = vsyncadd [#allocation4], %s788
      %s791 = sshll.u32 [#allocation7], 4
      %s792 = int_to_ptr.vmem [resolvable:$true] %s791
      %794 = dma.vmem_to_hbm [thread:$0]  %s792, 128, %s3, [#allocation4]
    $region25: #{tpu_custom_call.1} parent=1 // pred_fallthru
      _
    // Predicated region
    $region26: #{tpu_custom_call.1} parent=1 // pred_check
      _
    $region27: #{tpu_custom_call.1} parent=1 // pred_check_branch
      %796 = sbr.rel (0) target = $region29
    $region28: #{tpu_custom_call.1} parent=1 // pred_region
      %797 = dma.done [#allocation4], 128
    $region29: #{tpu_custom_call.1} parent=1 // pred_fallthru
      _
    %798 = vsyncpa [#allocation3], 1
    %799 = vsyncpa [#allocation6], 1
    %800 = vsyncpa [#allocation4], 1

// kernel: tpu_custom_call.1
$region0: #{tpu_custom_call.1}
  #allocation0 [shape = 'u32[]', space=smem, size = 0x4, offset = 0x4, fixed_abs, tag = 'smem constant byte address 0x4 - core index']
  #allocation1 [shape = 'u32[144,128]{1,0:T(1,128)}', space=vmem, size = 0x12000, scoped, tag = 'internal scratch']
  %s0 = inlined_call_operand.hbm [shape: bf16[8,768], index: 0, kind: input, shape index: {}]
  %s1 = inlined_call_operand.hbm [shape: bf16[768,256], index: 1, kind: input, shape index: {}]
  %s2 = inlined_call_operand.vmem [shape: f32[1,256], index: 2, kind: input, shape index: {}]
  %s3 = inlined_call_operand.hbm [shape: bf16[8,256], index: 3, kind: output, shape index: {}]
  %s4 = sld [smem:[#allocation0]]
  $region30: #{tpu_custom_call.1} parent=0
    _
  %s6 = ssub.s32 1, %s4
  %s7 = scalar_select 0, %s6, %s4
  $region1: #{tpu_custom_call.1} parent=0
    #allocation2 [shape = 'u8[12288]{0}', space=vmem, size = 0x3000, scoped, tag = 'input window, operand 0, single buffered']
    #allocation3 [shape = 's32[1]{0}', space=sflag, size = 0x4, scoped, tag = 'scoped memory for tpu_custom_call.1']
    #allocation4 [shape = 's32[1]{0}', space=sflag, size = 0x4, scoped, tag = 'scoped memory for tpu_custom_call.1']
    #allocation5 [shape = 'u8[393216]{0}', space=vmem, size = 0x60000, scoped, tag = 'input window, operand 1, single buffered']
    #allocation6 [shape = 's32[1]{0}', space=sflag, size = 0x4, scoped, tag = 'scoped memory for tpu_custom_call.1']
    #allocation7 [shape = 'u8[4096]{0}', space=vmem, size = 0x1000, scoped, tag = 'output window, operand 0, single buffered']
    %8 = vsyncpa [#allocation3], 0
    %9 = vsyncpa [#allocation6], 0
    %10 = vsyncpa [#allocation4], 0
    // Predicated region
    $region2: #{tpu_custom_call.1} parent=1 // pred_check
      _
    $region3: #{tpu_custom_call.1} parent=1 // pred_check_branch
      %12 = sbr.rel (0) target = $region5
    $region4: #{tpu_custom_call.1} parent=1 // pred_region
      %s14 = ssub.s32 384, 384
      %15 = vsyncadd [#allocation3], %s14
      %s17 = sshll.u32 [#allocation2], 4
      %s18 = int_to_ptr.vmem [resolvable:$true] %s17
      %20 = dma.hbm_to_vmem [thread:$0]  %s0, 384, %s18, [#allocation3]
    $region5: #{tpu_custom_call.1} parent=1 // pred_fallthru
      _
    // Predicated region
    $region6: #{tpu_custom_call.1} parent=1 // pred_check
      _
    $region7: #{tpu_custom_call.1} parent=1 // pred_check_branch
      %22 = sbr.rel (0) target = $region9
    $region8: #{tpu_custom_call.1} parent=1 // pred_region
      %s24 = ssub.s32 12288, 12288
      %25 = vsyncadd [#allocation6], %s24
      %s26 = sshll.u32 [#allocation5], 4
      %s27 = int_to_ptr.vmem [resolvable:$true] %s26
      %32 = dma.hbm_to_vmem [thread:$0]  %s1, 12288, %s27, [#allocation6], 128, 128, 8
    $region9: #{tpu_custom_call.1} parent=1 // pred_fallthru
      _
    // Predicated region
    $region10: #{tpu_custom_call.1} parent=1 // pred_check
      _
    $region11: #{tpu_custom_call.1} parent=1 // pred_check_branch
      %34 = sbr.rel (0) target = $region13
    $region12: #{tpu_custom_call.1} parent=1 // pred_region
      _
    $region13: #{tpu_custom_call.1} parent=1 // pred_fallthru
      _
    // Predicated region
    $region14: #{tpu_custom_call.1} parent=1 // pred_check
      _
    $region15: #{tpu_custom_call.1} parent=1 // pred_check_branch
      %36 = sbr.rel (0) target = $region17
    $region16: #{tpu_custom_call.1} parent=1 // pred_region
      %37 = dma.done [#allocation3], 384
    $region17: #{tpu_custom_call.1} parent=1 // pred_fallthru
      _
    // Predicated region
    $region18: #{tpu_custom_call.1} parent=1 // pred_check
      _
    $region19: #{tpu_custom_call.1} parent=1 // pred_check_branch
      %39 = sbr.rel (0) target = $region21
    $region20: #{tpu_custom_call.1} parent=1 // pred_region
      %40 = dma.done [#allocation6], 12288
    $region21: #{tpu_custom_call.1} parent=1 // pred_fallthru
      _
    %v41 = vld [vmem:[#allocation2] sm:$0xff]
    %v42 = vld [vmem:[#allocation2 + $0x8] sm:$0xff]
    %v43 = vld [vmem:[#allocation2 + $0x10] sm:$0xff]
    %v44 = vld [vmem:[#allocation5] sm:$0xff]
    %v45 = vld [vmem:[#allocation5 + $0x8] sm:$0xff]
    %v46 = vld [vmem:[#allocation5 + $0x10] sm:$0xff]
    %v47 = vld [vmem:[#allocation5 + $0x18] sm:$0xff]
    %v48 = vld [vmem:[#allocation5 + $0x20] sm:$0xff]
    %v49 = vld [vmem:[#allocation5 + $0x28] sm:$0xff]
    %v50 = vld [vmem:[#allocation5 + $0x30] sm:$0xff]
    %v51 = vld [vmem:[#allocation5 + $0x38] sm:$0xff]
    %v52 = vld [vmem:[#allocation5 + $0x40] sm:$0xff]
    %v53 = vld [vmem:[#allocation5 + $0x48] sm:$0xff]
    %v54 = vld [vmem:[#allocation5 + $0x50] sm:$0xff]
    %v55 = vld [vmem:[#allocation5 + $0x58] sm:$0xff]
    %v56 = vld [vmem:[#allocation5 + $0x60] sm:$0xff]
    %v57 = vld [vmem:[#allocation5 + $0x68] sm:$0xff]
    %v58 = vld [vmem:[#allocation5 + $0x70] sm:$0xff]
    %v59 = vld [vmem:[#allocation5 + $0x78] sm:$0xff]
    %v60 = vld [vmem:[#allocation5 + $0x80] sm:$0xff]
    %v61 = vld [vmem:[#allocation5 + $0x88] sm:$0xff]
    %v62 = vld [vmem:[#allocation5 + $0x90] sm:$0xff]
    %v63 = vld [vmem:[#allocation5 + $0x98] sm:$0xff]
    %v64 = vld [vmem:[#allocation5 + $0xa0] sm:$0xff]
    %v65 = vld [vmem:[#allocation5 + $0xa8] sm:$0xff]
    %v66 = vld [vmem:[#allocation5 + $0xb0] sm:$0xff]
    %v67 = vld [vmem:[#allocation5 + $0xb8] sm:$0xff]
    %v68 = vld [vmem:[#allocation5 + $0xc0] sm:$0xff]
    %v69 = vld [vmem:[#allocation5 + $0xc8] sm:$0xff]
    %v70 = vld [vmem:[#allocation5 + $0xd0] sm:$0xff]
    %v71 = vld [vmem:[#allocation5 + $0xd8] sm:$0xff]
    %v72 = vld [vmem:[#allocation5 + $0xe0] sm:$0xff]
    %v73 = vld [vmem:[#allocation5 + $0xe8] sm:$0xff]
    %v74 = vld [vmem:[#allocation5 + $0xf0] sm:$0xff]
    %v75 = vld [vmem:[#allocation5 + $0xf8] sm:$0xff]
    %v76 = vld [vmem:[#allocation5 + $0x100] sm:$0xff]
    %v77 = vld [vmem:[#allocation5 + $0x108] sm:$0xff]
    %v78 = vld [vmem:[#allocation5 + $0x110] sm:$0xff]
    %v79 = vld [vmem:[#allocation5 + $0x118] sm:$0xff]
    %v80 = vld [vmem:[#allocation5 + $0x120] sm:$0xff]
    %v81 = vld [vmem:[#allocation5 + $0x128] sm:$0xff]
    %v82 = vld [vmem:[#allocation5 + $0x130] sm:$0xff]
    %v83 = vld [vmem:[#allocation5 + $0x138] sm:$0xff]
    %v84 = vld [vmem:[#allocation5 + $0x140] sm:$0xff]
    %v85 = vld [vmem:[#allocation5 + $0x148] sm:$0xff]
    %v86 = vld [vmem:[#allocation5 + $0x150] sm:$0xff]
    %v87 = vld [vmem:[#allocation5 + $0x158] sm:$0xff]
    %v88 = vld [vmem:[#allocation5 + $0x160] sm:$0xff]
    %v89 = vld [vmem:[#allocation5 + $0x168] sm:$0xff]
    %v90 = vld [vmem:[#allocation5 + $0x170] sm:$0xff]
    %v91 = vld [vmem:[#allocation5 + $0x178] sm:$0xff]
    %v92 = vld [vmem:[#allocation5 + $0x180] sm:$0xff]
    %v93 = vld [vmem:[#allocation5 + $0x188] sm:$0xff]
    %v94 = vld [vmem:[#allocation5 + $0x190] sm:$0xff]
    %v95 = vld [vmem:[#allocation5 + $0x198] sm:$0xff]
    %v96 = vld [vmem:[#allocation5 + $0x1a0] sm:$0xff]
    %v97 = vld [vmem:[#allocation5 + $0x1a8] sm:$0xff]
    %v98 = vld [vmem:[#allocation5 + $0x1b0] sm:$0xff]
    %v99 = vld [vmem:[#allocation5 + $0x1b8] sm:$0xff]
    %v100 = vld [vmem:[#allocation5 + $0x1c0] sm:$0xff]
    %v101 = vld [vmem:[#allocation5 + $0x1c8] sm:$0xff]
    %v102 = vld [vmem:[#allocation5 + $0x1d0] sm:$0xff]
    %v103 = vld [vmem:[#allocation5 + $0x1d8] sm:$0xff]
    %v104 = vld [vmem:[#allocation5 + $0x1e0] sm:$0xff]
    %v105 = vld [vmem:[#allocation5 + $0x1e8] sm:$0xff]
    %v106 = vld [vmem:[#allocation5 + $0x1f0] sm:$0xff]
    %v107 = vld [vmem:[#allocation5 + $0x1f8] sm:$0xff]
    %v108 = vld [vmem:[#allocation5 + $0x200] sm:$0xff]
    %v109 = vld [vmem:[#allocation5 + $0x208] sm:$0xff]
    %v110 = vld [vmem:[#allocation5 + $0x210] sm:$0xff]
    %v111 = vld [vmem:[#allocation5 + $0x218] sm:$0xff]
    %v112 = vld [vmem:[#allocation5 + $0x220] sm:$0xff]
    %v113 = vld [vmem:[#allocation5 + $0x228] sm:$0xff]
    %v114 = vld [vmem:[#allocation5 + $0x230] sm:$0xff]
    %v115 = vld [vmem:[#allocation5 + $0x238] sm:$0xff]
    %v116 = vld [vmem:[#allocation5 + $0x240] sm:$0xff]
    %v117 = vld [vmem:[#allocation5 + $0x248] sm:$0xff]
    %v118 = vld [vmem:[#allocation5 + $0x250] sm:$0xff]
    %v119 = vld [vmem:[#allocation5 + $0x258] sm:$0xff]
    %v120 = vld [vmem:[#allocation5 + $0x260] sm:$0xff]
    %v121 = vld [vmem:[#allocation5 + $0x268] sm:$0xff]
    %v122 = vld [vmem:[#allocation5 + $0x270] sm:$0xff]
    %v123 = vld [vmem:[#allocation5 + $0x278] sm:$0xff]
    %v124 = vld [vmem:[#allocation5 + $0x280] sm:$0xff]
    %v125 = vld [vmem:[#allocation5 + $0x288] sm:$0xff]
    %v126 = vld [vmem:[#allocation5 + $0x290] sm:$0xff]
    %v127 = vld [vmem:[#allocation5 + $0x298] sm:$0xff]
    %v128 = vld [vmem:[#allocation5 + $0x2a0] sm:$0xff]
    %v129 = vld [vmem:[#allocation5 + $0x2a8] sm:$0xff]
    %v130 = vld [vmem:[#allocation5 + $0x2b0] sm:$0xff]
    %v131 = vld [vmem:[#allocation5 + $0x2b8] sm:$0xff]
    %v132 = vld [vmem:[#allocation5 + $0x2c0] sm:$0xff]
    %v133 = vld [vmem:[#allocation5 + $0x2c8] sm:$0xff]
    %v134 = vld [vmem:[#allocation5 + $0x2d0] sm:$0xff]
    %v135 = vld [vmem:[#allocation5 + $0x2d8] sm:$0xff]
    %v136 = vld [vmem:[#allocation5 + $0x2e0] sm:$0xff]
    %v137 = vld [vmem:[#allocation5 + $0x2e8] sm:$0xff]
    %v138 = vld [vmem:[#allocation5 + $0x2f0] sm:$0xff]
    %v139 = vld [vmem:[#allocation5 + $0x2f8] sm:$0xff]
    %v140 = vld [vmem:[%s2] sm:$0x3]
    %v142 = vlaneseq
    %v143 = vshrl.u32 %v142, 7
    %v144 = vsub.s32 0, %v143
    %v145 = vrot.slane %v140, %v144
    %v146 = vlaneseq
    %v147 = vshrl.u32 %v146, 7
    %v148 = vsub.s32 1, %v147
    %v149 = vrot.slane %v140, %v148
    %v155 = vunpack.c.l.b16 %v41
    %v156 = vunpack.c.h.b16 %v41
    %v157 = vunpack.c.l.b16 %v42
    %v158 = vunpack.c.h.b16 %v42
    %v159 = vunpack.c.l.b16 %v43
    %v160 = vunpack.c.h.b16 %v43
    %v161 = vpack.c.b16 %v155, %v155
    %v162 = vpack.c.b16 %v156, %v156
    %v163 = vpack.c.b16 %v157, %v157
    %v164 = vpack.c.b16 %v158, %v158
    %v165 = vpack.c.b16 %v159, %v159
    %v166 = vpack.c.b16 %v160, %v160
    %v269 = vunpack.c.l.b16 %v44
    %v270 = vunpack.c.h.b16 %v44
    %v271 = vunpack.c.l.b16 %v45
    %v272 = vunpack.c.h.b16 %v45
    %v273 = vunpack.c.l.b16 %v46
    %v274 = vunpack.c.h.b16 %v46
    %v275 = vunpack.c.l.b16 %v47
    %v276 = vunpack.c.h.b16 %v47
    %v277 = vunpack.c.l.b16 %v48
    %v278 = vunpack.c.h.b16 %v48
    %v279 = vunpack.c.l.b16 %v49
    %v280 = vunpack.c.h.b16 %v49
    %v281 = vunpack.c.l.b16 %v50
    %v282 = vunpack.c.h.b16 %v50
    %v283 = vunpack.c.l.b16 %v51
    %v284 = vunpack.c.h.b16 %v51
    %v285 = vunpack.c.l.b16 %v52
    %v286 = vunpack.c.h.b16 %v52
    %v287 = vunpack.c.l.b16 %v53
    %v288 = vunpack.c.h.b16 %v53
    %v289 = vunpack.c.l.b16 %v54
    %v290 = vunpack.c.h.b16 %v54
    %v291 = vunpack.c.l.b16 %v55
    %v292 = vunpack.c.h.b16 %v55
    %v293 = vunpack.c.l.b16 %v56
    %v294 = vunpack.c.h.b16 %v56
    %v295 = vunpack.c.l.b16 %v57
    %v296 = vunpack.c.h.b16 %v57
    %v297 = vunpack.c.l.b16 %v58
    %v298 = vunpack.c.h.b16 %v58
    %v299 = vunpack.c.l.b16 %v59
    %v300 = vunpack.c.h.b16 %v59
    %v301 = vunpack.c.l.b16 %v60
    %v302 = vunpack.c.h.b16 %v60
    %v303 = vunpack.c.l.b16 %v61
    %v304 = vunpack.c.h.b16 %v61
    %v305 = vunpack.c.l.b16 %v62
    %v306 = vunpack.c.h.b16 %v62
    %v307 = vunpack.c.l.b16 %v63
    %v308 = vunpack.c.h.b16 %v63
    %v309 = vunpack.c.l.b16 %v64
    %v310 = vunpack.c.h.b16 %v64
    %v311 = vunpack.c.l.b16 %v65
    %v312 = vunpack.c.h.b16 %v65
    %v313 = vunpack.c.l.b16 %v66
    %v314 = vunpack.c.h.b16 %v66
    %v315 = vunpack.c.l.b16 %v67
    %v316 = vunpack.c.h.b16 %v67
    %v317 = vunpack.c.l.b16 %v68
    %v318 = vunpack.c.h.b16 %v68
    %v319 = vunpack.c.l.b16 %v69
    %v320 = vunpack.c.h.b16 %v69
    %v321 = vunpack.c.l.b16 %v70
    %v322 = vunpack.c.h.b16 %v70
    %v323 = vunpack.c.l.b16 %v71
    %v324 = vunpack.c.h.b16 %v71
    %v325 = vunpack.c.l.b16 %v72
    %v326 = vunpack.c.h.b16 %v72
    %v327 = vunpack.c.l.b16 %v73
    %v328 = vunpack.c.h.b16 %v73
    %v329 = vunpack.c.l.b16 %v74
    %v330 = vunpack.c.h.b16 %v74
    %v331 = vunpack.c.l.b16 %v75
    %v332 = vunpack.c.h.b16 %v75
    %v333 = vunpack.c.l.b16 %v76
    %v334 = vunpack.c.h.b16 %v76
    %v335 = vunpack.c.l.b16 %v77
    %v336 = vunpack.c.h.b16 %v77
    %v337 = vunpack.c.l.b16 %v78
    %v338 = vunpack.c.h.b16 %v78
    %v339 = vunpack.c.l.b16 %v79
    %v340 = vunpack.c.h.b16 %v79
    %v341 = vunpack.c.l.b16 %v80
    %v342 = vunpack.c.h.b16 %v80
    %v343 = vunpack.c.l.b16 %v81
    %v344 = vunpack.c.h.b16 %v81
    %v345 = vunpack.c.l.b16 %v82
    %v346 = vunpack.c.h.b16 %v82
    %v347 = vunpack.c.l.b16 %v83
    %v348 = vunpack.c.h.b16 %v83
    %v349 = vunpack.c.l.b16 %v84
    %v350 = vunpack.c.h.b16 %v84
    %v351 = vunpack.c.l.b16 %v85
    %v352 = vunpack.c.h.b16 %v85
    %v353 = vunpack.c.l.b16 %v86
    %v354 = vunpack.c.h.b16 %v86
    %v355 = vunpack.c.l.b16 %v87
    %v356 = vunpack.c.h.b16 %v87
    %v357 = vunpack.c.l.b16 %v88
    %v358 = vunpack.c.h.b16 %v88
    %v359 = vunpack.c.l.b16 %v89
    %v360 = vunpack.c.h.b16 %v89
    %v361 = vunpack.c.l.b16 %v90
    %v362 = vunpack.c.h.b16 %v90
    %v363 = vunpack.c.l.b16 %v91
    %v364 = vunpack.c.h.b16 %v91
    %v365 = vunpack.c.l.b16 %v92
    %v366 = vunpack.c.h.b16 %v92
    %v367 = vunpack.c.l.b16 %v93
    %v368 = vunpack.c.h.b16 %v93
    %v369 = vunpack.c.l.b16 %v94
    %v370 = vunpack.c.h.b16 %v94
    %v371 = vunpack.c.l.b16 %v95
    %v372 = vunpack.c.h.b16 %v95
    %v373 = vunpack.c.l.b16 %v96
    %v374 = vunpack.c.h.b16 %v96
    %v375 = vunpack.c.l.b16 %v97
    %v376 = vunpack.c.h.b16 %v97
    %v377 = vunpack.c.l.b16 %v98
    %v378 = vunpack.c.h.b16 %v98
    %v379 = vunpack.c.l.b16 %v99
    %v380 = vunpack.c.h.b16 %v99
    %v381 = vunpack.c.l.b16 %v100
    %v382 = vunpack.c.h.b16 %v100
    %v383 = vunpack.c.l.b16 %v101
    %v384 = vunpack.c.h.b16 %v101
    %v385 = vunpack.c.l.b16 %v102
    %v386 = vunpack.c.h.b16 %v102
    %v387 = vunpack.c.l.b16 %v103
    %v388 = vunpack.c.h.b16 %v103
    %v389 = vunpack.c.l.b16 %v104
    %v390 = vunpack.c.h.b16 %v104
    %v391 = vunpack.c.l.b16 %v105
    %v392 = vunpack.c.h.b16 %v105
    %v393 = vunpack.c.l.b16 %v106
    %v394 = vunpack.c.h.b16 %v106
    %v395 = vunpack.c.l.b16 %v107
    %v396 = vunpack.c.h.b16 %v107
    %v397 = vunpack.c.l.b16 %v108
    %v398 = vunpack.c.h.b16 %v108
    %v399 = vunpack.c.l.b16 %v109
    %v400 = vunpack.c.h.b16 %v109
    %v401 = vunpack.c.l.b16 %v110
    %v402 = vunpack.c.h.b16 %v110
    %v403 = vunpack.c.l.b16 %v111
    %v404 = vunpack.c.h.b16 %v111
    %v405 = vunpack.c.l.b16 %v112
    %v406 = vunpack.c.h.b16 %v112
    %v407 = vunpack.c.l.b16 %v113
    %v408 = vunpack.c.h.b16 %v113
    %v409 = vunpack.c.l.b16 %v114
    %v410 = vunpack.c.h.b16 %v114
    %v411 = vunpack.c.l.b16 %v115
    %v412 = vunpack.c.h.b16 %v115
    %v413 = vunpack.c.l.b16 %v116
    %v414 = vunpack.c.h.b16 %v116
    %v415 = vunpack.c.l.b16 %v117
    %v416 = vunpack.c.h.b16 %v117
    %v417 = vunpack.c.l.b16 %v118
    %v418 = vunpack.c.h.b16 %v118
    %v419 = vunpack.c.l.b16 %v119
    %v420 = vunpack.c.h.b16 %v119
    %v421 = vunpack.c.l.b16 %v120
    %v422 = vunpack.c.h.b16 %v120
    %v423 = vunpack.c.l.b16 %v121
    %v424 = vunpack.c.h.b16 %v121
    %v425 = vunpack.c.l.b16 %v122
    %v426 = vunpack.c.h.b16 %v122
    %v427 = vunpack.c.l.b16 %v123
    %v428 = vunpack.c.h.b16 %v123
    %v429 = vunpack.c.l.b16 %v124
    %v430 = vunpack.c.h.b16 %v124
    %v431 = vunpack.c.l.b16 %v125
    %v432 = vunpack.c.h.b16 %v125
    %v433 = vunpack.c.l.b16 %v126
    %v434 = vunpack.c.h.b16 %v126
    %v435 = vunpack.c.l.b16 %v127
    %v436 = vunpack.c.h.b16 %v127
    %v437 = vunpack.c.l.b16 %v128
    %v438 = vunpack.c.h.b16 %v128
    %v439 = vunpack.c.l.b16 %v129
    %v440 = vunpack.c.h.b16 %v129
    %v441 = vunpack.c.l.b16 %v130
    %v442 = vunpack.c.h.b16 %v130
    %v443 = vunpack.c.l.b16 %v131
    %v444 = vunpack.c.h.b16 %v131
    %v445 = vunpack.c.l.b16 %v132
    %v446 = vunpack.c.h.b16 %v132
    %v447 = vunpack.c.l.b16 %v133
    %v448 = vunpack.c.h.b16 %v133
    %v449 = vunpack.c.l.b16 %v134
    %v450 = vunpack.c.h.b16 %v134
    %v451 = vunpack.c.l.b16 %v135
    %v452 = vunpack.c.h.b16 %v135
    %v453 = vunpack.c.l.b16 %v136
    %v454 = vunpack.c.h.b16 %v136
    %v455 = vunpack.c.l.b16 %v137
    %v456 = vunpack.c.h.b16 %v137
    %v457 = vunpack.c.l.b16 %v138
    %v458 = vunpack.c.h.b16 %v138
    %v459 = vunpack.c.l.b16 %v139
    %v460 = vunpack.c.h.b16 %v139
    %v461 = vpack.c.b16 %v271, %v269
    %v462 = vpack.c.b16 %v272, %v270
    %v463 = vpack.c.b16 %v275, %v273
    %v464 = vpack.c.b16 %v276, %v274
    %v465 = vpack.c.b16 %v279, %v277
    %v466 = vpack.c.b16 %v280, %v278
    %v467 = vpack.c.b16 %v283, %v281
    %v468 = vpack.c.b16 %v284, %v282
    %v469 = vpack.c.b16 %v287, %v285
    %v470 = vpack.c.b16 %v288, %v286
    %v471 = vpack.c.b16 %v291, %v289
    %v472 = vpack.c.b16 %v292, %v290
    %v473 = vpack.c.b16 %v295, %v293
    %v474 = vpack.c.b16 %v296, %v294
    %v475 = vpack.c.b16 %v299, %v297
    %v476 = vpack.c.b16 %v300, %v298
    %v477 = vpack.c.b16 %v303, %v301
    %v478 = vpack.c.b16 %v304, %v302
    %v479 = vpack.c.b16 %v307, %v305
    %v480 = vpack.c.b16 %v308, %v306
    %v481 = vpack.c.b16 %v311, %v309
    %v482 = vpack.c.b16 %v312, %v310
    %v483 = vpack.c.b16 %v315, %v313
    %v484 = vpack.c.b16 %v316, %v314
    %v485 = vpack.c.b16 %v319, %v317
    %v486 = vpack.c.b16 %v320, %v318
    %v487 = vpack.c.b16 %v323, %v321
    %v488 = vpack.c.b16 %v324, %v322
    %v489 = vpack.c.b16 %v327, %v325
    %v490 = vpack.c.b16 %v328, %v326
    %v491 = vpack.c.b16 %v331, %v329
    %v492 = vpack.c.b16 %v332, %v330
    %v493 = vpack.c.b16 %v335, %v333
    %v494 = vpack.c.b16 %v336, %v334
    %v495 = vpack.c.b16 %v339, %v337
    %v496 = vpack.c.b16 %v340, %v338
    %v497 = vpack.c.b16 %v343, %v341
    %v498 = vpack.c.b16 %v344, %v342
    %v499 = vpack.c.b16 %v347, %v345
    %v500 = vpack.c.b16 %v348, %v346
    %v501 = vpack.c.b16 %v351, %v349
    %v502 = vpack.c.b16 %v352, %v350
    %v503 = vpack.c.b16 %v355, %v353
    %v504 = vpack.c.b16 %v356, %v354
    %v505 = vpack.c.b16 %v359, %v357
    %v506 = vpack.c.b16 %v360, %v358
    %v507 = vpack.c.b16 %v363, %v361
    %v508 = vpack.c.b16 %v364, %v362
    %v509 = vpack.c.b16 %v367, %v365
    %v510 = vpack.c.b16 %v368, %v366
    %v511 = vpack.c.b16 %v371, %v369
    %v512 = vpack.c.b16 %v372, %v370
    %v513 = vpack.c.b16 %v375, %v373
    %v514 = vpack.c.b16 %v376, %v374
    %v515 = vpack.c.b16 %v379, %v377
    %v516 = vpack.c.b16 %v380, %v378
    %v517 = vpack.c.b16 %v383, %v381
    %v518 = vpack.c.b16 %v384, %v382
    %v519 = vpack.c.b16 %v387, %v385
    %v520 = vpack.c.b16 %v388, %v386
    %v521 = vpack.c.b16 %v391, %v389
    %v522 = vpack.c.b16 %v392, %v390
    %v523 = vpack.c.b16 %v395, %v393
    %v524 = vpack.c.b16 %v396, %v394
    %v525 = vpack.c.b16 %v399, %v397
    %v526 = vpack.c.b16 %v400, %v398
    %v527 = vpack.c.b16 %v403, %v401
    %v528 = vpack.c.b16 %v404, %v402
    %v529 = vpack.c.b16 %v407, %v405
    %v530 = vpack.c.b16 %v408, %v406
    %v531 = vpack.c.b16 %v411, %v409
    %v532 = vpack.c.b16 %v412, %v410
    %v533 = vpack.c.b16 %v415, %v413
    %v534 = vpack.c.b16 %v416, %v414
    %v535 = vpack.c.b16 %v419, %v417
    %v536 = vpack.c.b16 %v420, %v418
    %v537 = vpack.c.b16 %v423, %v421
    %v538 = vpack.c.b16 %v424, %v422
    %v539 = vpack.c.b16 %v427, %v425
    %v540 = vpack.c.b16 %v428, %v426
    %v541 = vpack.c.b16 %v431, %v429
    %v542 = vpack.c.b16 %v432, %v430
    %v543 = vpack.c.b16 %v435, %v433
    %v544 = vpack.c.b16 %v436, %v434
    %v545 = vpack.c.b16 %v439, %v437
    %v546 = vpack.c.b16 %v440, %v438
    %v547 = vpack.c.b16 %v443, %v441
    %v548 = vpack.c.b16 %v444, %v442
    %v549 = vpack.c.b16 %v447, %v445
    %v550 = vpack.c.b16 %v448, %v446
    %v551 = vpack.c.b16 %v451, %v449
    %v552 = vpack.c.b16 %v452, %v450
    %v553 = vpack.c.b16 %v455, %v453
    %v554 = vpack.c.b16 %v456, %v454
    %v555 = vpack.c.b16 %v459, %v457
    %v556 = vpack.c.b16 %v460, %v458
    %653 = vmatprep.subr.bf16.mxu0 %v462
    %654 = vmatpush1.bf16.msra.mxu0 %v461
    %655 = vmatprep.subr.bf16.mxu0 %v464
    %656 = vmatpush1.bf16.msra.mxu0 %v463
    %657 = vmatprep.subr.bf16.mxu0 %v466
    %658 = vmatpush1.bf16.msra.mxu0 %v465
    %659 = vmatprep.subr.bf16.mxu0 %v468
    %660 = vmatpush1.bf16.msra.mxu0 %v467
    %661 = vmatprep.subr.bf16.mxu0 %v470
    %662 = vmatpush1.bf16.msra.mxu0 %v469
    %663 = vmatprep.subr.bf16.mxu0 %v472
    %664 = vmatpush1.bf16.msra.mxu0 %v471
    %665 = vmatprep.subr.bf16.mxu0 %v474
    %666 = vmatpush1.bf16.msra.mxu0 %v473
    %667 = vmatprep.subr.bf16.mxu0 %v476
    %668 = vmatpush1.bf16.msra.mxu0 %v475
    %669 = vmatprep.subr.bf16.mxu0 %v478
    %670 = vmatpush1.bf16.msra.mxu0 %v477
    %671 = vmatprep.subr.bf16.mxu0 %v480
    %672 = vmatpush1.bf16.msra.mxu0 %v479
    %673 = vmatprep.subr.bf16.mxu0 %v482
    %674 = vmatpush1.bf16.msra.mxu0 %v481
    %675 = vmatprep.subr.bf16.mxu0 %v484
    %676 = vmatpush1.bf16.msra.mxu0 %v483
    %677 = vmatprep.subr.bf16.mxu0 %v486
    %678 = vmatpush1.bf16.msra.mxu0 %v485
    %679 = vmatprep.subr.bf16.mxu0 %v488
    %680 = vmatpush1.bf16.msra.mxu0 %v487
    %681 = vmatprep.subr.bf16.mxu0 %v490
    %682 = vmatpush1.bf16.msra.mxu0 %v489
    %683 = vmatprep.subr.bf16.mxu0 %v492
    %684 = vmatpush1.bf16.msra.mxu0 %v491
    %685 = vmatprep.mubr.bf16.mxu0 %v162
    %686 = vmatmul.mubr.bf16.gmra.mrb[0].mxu0 %v161
    %v687 = vpop.f32.mrb[0].mxu0
    %v688 = vadd.f32 %v145, %v687
    %v689 = vpop.f32.mrb[0].mxu0
    %v690 = vadd.f32 %v149, %v689
    %v691 = vpop.f32.mrb[0].mxu0
    %v692 = vpop.f32.mrb[0].mxu0
    %693 = vdwg.mxu0
    %694 = vmatprep.subr.bf16.mxu0 %v494
    %695 = vmatpush1.bf16.msra.mxu0 %v493
    %696 = vmatprep.subr.bf16.mxu0 %v496
    %697 = vmatpush1.bf16.msra.mxu0 %v495
    %698 = vmatprep.subr.bf16.mxu0 %v498
    %699 = vmatpush1.bf16.msra.mxu0 %v497
    %700 = vmatprep.subr.bf16.mxu0 %v500
    %701 = vmatpush1.bf16.msra.mxu0 %v499
    %702 = vmatprep.subr.bf16.mxu0 %v502
    %703 = vmatpush1.bf16.msra.mxu0 %v501
    %704 = vmatprep.subr.bf16.mxu0 %v504
    %705 = vmatpush1.bf16.msra.mxu0 %v503
    %706 = vmatprep.subr.bf16.mxu0 %v506
    %707 = vmatpush1.bf16.msra.mxu0 %v505
    %708 = vmatprep.subr.bf16.mxu0 %v508
    %709 = vmatpush1.bf16.msra.mxu0 %v507
    %710 = vmatprep.subr.bf16.mxu0 %v510
    %711 = vmatpush1.bf16.msra.mxu0 %v509
    %712 = vmatprep.subr.bf16.mxu0 %v512
    %713 = vmatpush1.bf16.msra.mxu0 %v511
    %714 = vmatprep.subr.bf16.mxu0 %v514
    %715 = vmatpush1.bf16.msra.mxu0 %v513
    %716 = vmatprep.subr.bf16.mxu0 %v516
    %717 = vmatpush1.bf16.msra.mxu0 %v515
    %718 = vmatprep.subr.bf16.mxu0 %v518
    %719 = vmatpush1.bf16.msra.mxu0 %v517
    %720 = vmatprep.subr.bf16.mxu0 %v520
    %721 = vmatpush1.bf16.msra.mxu0 %v519
    %722 = vmatprep.subr.bf16.mxu0 %v522
    %723 = vmatpush1.bf16.msra.mxu0 %v521
    %724 = vmatprep.subr.bf16.mxu0 %v524
    %725 = vmatpush1.bf16.msra.mxu0 %v523
    %726 = vmatprep.mubr.bf16.mxu0 %v164
    %727 = vmatmul.mubr.bf16.gmra.mrb[0].mxu0 %v163
    %v728 = vpop.f32.mrb[0].mxu0
    %v729 = vadd.f32 %v688, %v728
    %v730 = vpop.f32.mrb[0].mxu0
    %v731 = vadd.f32 %v690, %v730
    %v732 = vpop.f32.mrb[0].mxu0
    %v733 = vpop.f32.mrb[0].mxu0
    %734 = vdwg.mxu0
    %735 = vmatprep.subr.bf16.mxu0 %v526
    %736 = vmatpush1.bf16.msra.mxu0 %v525
    %737 = vmatprep.subr.bf16.mxu0 %v528
    %738 = vmatpush1.bf16.msra.mxu0 %v527
    %739 = vmatprep.subr.bf16.mxu0 %v530
    %740 = vmatpush1.bf16.msra.mxu0 %v529
    %741 = vmatprep.subr.bf16.mxu0 %v532
    %742 = vmatpush1.bf16.msra.mxu0 %v531
    %743 = vmatprep.subr.bf16.mxu0 %v534
    %744 = vmatpush1.bf16.msra.mxu0 %v533
    %745 = vmatprep.subr.bf16.mxu0 %v536
    %746 = vmatpush1.bf16.msra.mxu0 %v535
    %747 = vmatprep.subr.bf16.mxu0 %v538
    %748 = vmatpush1.bf16.msra.mxu0 %v537
    %749 = vmatprep.subr.bf16.mxu0 %v540
    %750 = vmatpush1.bf16.msra.mxu0 %v539
    %751 = vmatprep.subr.bf16.mxu0 %v542
    %752 = vmatpush1.bf16.msra.mxu0 %v541
    %753 = vmatprep.subr.bf16.mxu0 %v544
    %754 = vmatpush1.bf16.msra.mxu0 %v543
    %755 = vmatprep.subr.bf16.mxu0 %v546
    %756 = vmatpush1.bf16.msra.mxu0 %v545
    %757 = vmatprep.subr.bf16.mxu0 %v548
    %758 = vmatpush1.bf16.msra.mxu0 %v547
    %759 = vmatprep.subr.bf16.mxu0 %v550
    %760 = vmatpush1.bf16.msra.mxu0 %v549
    %761 = vmatprep.subr.bf16.mxu0 %v552
    %762 = vmatpush1.bf16.msra.mxu0 %v551
    %763 = vmatprep.subr.bf16.mxu0 %v554
    %764 = vmatpush1.bf16.msra.mxu0 %v553
    %765 = vmatprep.subr.bf16.mxu0 %v556
    %766 = vmatpush1.bf16.msra.mxu0 %v555
    %767 = vmatprep.mubr.bf16.mxu0 %v166
    %768 = vmatmul.mubr.bf16.gmra.mrb[0].mxu0 %v165
    %v769 = vpop.f32.mrb[0].mxu0
    %v770 = vadd.f32 %v729, %v769
    %v771 = vpop.f32.mrb[0].mxu0
    %v772 = vadd.f32 %v731, %v771
    %v773 = vpop.f32.mrb[0].mxu0
    %v774 = vpop.f32.mrb[0].mxu0
    %775 = vdwg.mxu0
    %v776 = vpack.c.bf16 %v770, %v770
    %v777 = vpack.c.bf16 %v772, %v772
    %v780 = vunpack.c.l.b16 %v776
    %v781 = vunpack.c.l.b16 %v777
    %v782 = vpack.c.b16 %v781, %v780
    %784 = vst [vmem:[#allocation7] sm:$0xff] %v782
    // Predicated region
    $region22: #{tpu_custom_call.1} parent=1 // pred_check
      _
    $region23: #{tpu_custom_call.1} parent=1 // pred_check_branch
      %786 = sbr.rel (0) target = $region25
    $region24: #{tpu_custom_call.1} parent=1 // pred_region
      %s788 = ssub.s32 128, 128
      %789 = vsyncadd [#allocation4], %s788
      %s791 = sshll.u32 [#allocation7], 4
      %s792 = int_to_ptr.vmem [resolvable:$true] %s791
      %794 = dma.vmem_to_hbm [thread:$0]  %s792, 128, %s3, [#allocation4]
    $region25: #{tpu_custom_call.1} parent=1 // pred_fallthru
      _
    // Predicated region
    $region26: #{tpu_custom_call.1} parent=1 // pred_check
      _
    $region27: #{tpu_custom_call.1} parent=1 // pred_check_branch
      %796 = sbr.rel (0) target = $region29
    $region28: #{tpu_custom_call.1} parent=1 // pred_region
      %797 = dma.done [#allocation4], 128
    $region29: #{tpu_custom_call.1} parent=1 // pred_fallthru
      _
    %798 = vsyncpa [#allocation3], 1
    %799 = vsyncpa [#allocation6], 1
    %800 = vsyncpa [#allocation4], 1

</llo_original>
